<compile_context>
chip_gen: v6e
topology: v6e:2x2x1
jax: 0.10.0
libtpu: 0.0.40
codegen_flags: <defaults>
</compile_context>

<pallas_src>
import functools

import jax
import jax.numpy as jnp
from jax import lax
from jax.experimental import pallas as pl
from jax.experimental.pallas import tpu as pltpu


def _round_up(x: int, m: int) -> int:
    return ((x + m - 1) // m) * m


def _topk_kernel(h_ref, tab_ref, idx_ref, vals_sc, idxs_sc, *,
                 topk: int, num_items: int, tile_n: int, needs_mask: bool):
    """One (batch-block, item-tile) grid step.

    h_ref   : [TB, Hp]       bf16  hidden states (resident across item axis)
    tab_ref : [Hp, tile_n]   bf16  current item-embedding tile (streamed)
    idx_ref : [TB, K]        int32 output indices (written on the last tile)
    vals_sc : [TB, 128]      f32   running top-k values  (lanes 0..K-1 real)
    idxs_sc : [TB, 128]      int32 running top-k indices (lanes 0..K-1 real)
    """
    n_i = pl.program_id(1)
    n_last = pl.num_programs(1) - 1
    n_blk = tile_n // 128

    NEG_INF = jnp.float32(-jnp.inf)
    BIG_IDX = jnp.int32(jnp.iinfo(jnp.int32).max)

    @pl.when(n_i == 0)
    def _init():
        vals_sc[...] = jnp.full(vals_sc.shape, NEG_INF, jnp.float32)
        idxs_sc[...] = jnp.full(idxs_sc.shape, BIG_IDX, jnp.int32)

    # Scores for this tile: [TB, tile_n].  bf16 operands, f32 accumulation,
    # plain NN contraction (table already [H, N] in HBM).
    scores = jnp.dot(h_ref[...], tab_ref[...],
                     preferred_element_type=jnp.float32)

    lane = lax.broadcasted_iota(jnp.int32, (1, 128), 1)   # [1, 128]
    base = n_i * tile_n                                    # scalar, int32

    # Lane-aligned 128-wide chunks of this tile: values + GLOBAL column index.
    chunk_v = [scores[:, b * 128:(b + 1) * 128] for b in range(n_blk)]
    chunk_c = [base + b * 128 + lane for b in range(n_blk)]
    if needs_mask:  # compile-time: only when N is not a multiple of tile_n
        chunk_v = [jnp.where(c < num_items, v, NEG_INF)
                   for v, c in zip(chunk_v, chunk_c)]

    # Working copies of the running top-k (smallest global indices).
    run_v = vals_sc[...]
    run_c = idxs_sc[...]

    new_v, new_i = [], []
    for _ in range(topk):  # small compile-time constant -> unrolled
        # VPU fold down to [TB, 128]: running buffer first, then chunks in
        # ascending global-index order; strict '>' keeps the lowest index on
        # value ties within a lane.
        best_v, best_c = run_v, run_c
        for v, c in zip(chunk_v, chunk_c):
            take = v > best_v
            best_v = jnp.where(take, v, best_v)
            best_c = jnp.where(take, c, best_c)
        # Only 128-wide XLU reductions per k.
        m = jnp.max(best_v, axis=-1, keepdims=True)                      # [TB, 1]
        sel = jnp.min(jnp.where(best_v == m, best_c, BIG_IDX),
                      axis=-1, keepdims=True)                            # [TB, 1]
        new_v.append(m)
        new_i.append(sel)
        # Global indices of real candidates are unique -> masks exactly one.
        run_v = jnp.where(run_c == sel, NEG_INF, run_v)
        chunk_v = [jnp.where(c == sel, NEG_INF, v)
                   for v, c in zip(chunk_v, chunk_c)]

    @pl.when(n_i != n_last)
    def _carry():
        # Re-pack the K selected entries into lanes 0..K-1 of the 128-lane
        # scratch (everything stays 128-lane dense; no ragged stores).
        nv = jnp.full(vals_sc.shape, NEG_INF, jnp.float32)
        ni = jnp.full(idxs_sc.shape, BIG_IDX, jnp.int32)
        for j in range(topk):
            hit = lane == j
            nv = jnp.where(hit, new_v[j], nv)
            ni = jnp.where(hit, new_i[j], ni)
        vals_sc[...] = nv
        idxs_sc[...] = ni

    @pl.when(n_i == n_last)
    def _finalize():
        idx_ref[...] = jnp.concatenate(new_i, axis=-1)


def topk_decorator_forward(item_seq, item_seq_len, item_embedding, topk: int,
                           *, tile_n: int = 1024):
    """JAX wrapper reproducing TopKDecorator.forward semantics.

    item_seq:       [B, L] int32 item ids
    item_seq_len:   [B]    int32 valid lengths
    item_embedding: [N, H] float32 table (the synthetic recommender's weights)
    returns:        [B, topk] int32 indices of the top-k scores (descending)
    """
    B, L = item_seq.shape
    N, H = item_embedding.shape
    assert 1 <= topk <= 128, "running top-k scratch holds at most 128 entries"

    # --- synthetic recommender glue (plain JAX): gather + masked mean pool ---
    emb = item_embedding[item_seq]                                   # [B, L, H]
    pos = jnp.arange(L, dtype=jnp.int32)[None, :]                    # [1, L]
    mask = (pos < item_seq_len[:, None]).astype(jnp.float32)         # [B, L]
    denom = jnp.maximum(item_seq_len.astype(jnp.float32), 1.0)[:, None]
    hidden = jnp.einsum("blh,bl->bh", emb, mask) / denom             # [B, H] f32

    # --- tiling / padding ---------------------------------------------------
    h_pad = _round_up(H, 16)
    n_ceil = _round_up(N, 128)
    # Keep one table tile <= 8 MiB so the double-buffered working set stays
    # well under v7x's 64 MiB VMEM (plenty of headroom on v5e/v6e's 128 MiB).
    budget_tile = max(128, (8 * 1024 * 1024 // (2 * h_pad)) // 128 * 128)
    tile_n = max(128, min(_round_up(tile_n, 128), n_ceil, budget_tile))
    n_pad = _round_up(N, tile_n)
    assert topk <= min(N, tile_n), "topk must not exceed the first item tile"

    tb = 256 if B > 256 else _round_up(B, 16)
    b_pad = _round_up(B, tb)

    # bf16 streaming halves HBM bytes; accumulation stays f32.
    hidden_p = jnp.pad(hidden, ((0, b_pad - B), (0, h_pad - H))).astype(jnp.bfloat16)
    # One-time transpose to [H, N]: lane-dense table tiles, no in-kernel vxpose.
    table_p = jnp.pad(item_embedding.T,
                      ((0, h_pad - H), (0, n_pad - N))).astype(jnp.bfloat16)

    grid = (b_pad // tb, n_pad // tile_n)
    kernel = functools.partial(_topk_kernel, topk=topk, num_items=N,
                               tile_n=tile_n, needs_mask=(n_pad != N))

    out = pl.pallas_call(
        kernel,
        out_shape=jax.ShapeDtypeStruct((b_pad, topk), jnp.int32),
        grid_spec=pltpu.PrefetchScalarGridSpec(
            num_scalar_prefetch=0,
            grid=grid,
            in_specs=[
                pl.BlockSpec((tb, h_pad), lambda b, n: (b, 0)),       # hidden: resident over n
                pl.BlockSpec((h_pad, tile_n), lambda b, n: (0, n)),   # table tile: streamed
            ],
            out_specs=pl.BlockSpec((tb, topk), lambda b, n: (b, 0)),
            scratch_shapes=[
                pltpu.VMEM((tb, 128), jnp.float32),                   # running top-k values
                pltpu.VMEM((tb, 128), jnp.int32),                     # running top-k indices
            ],
        ),
        compiler_params=pltpu.CompilerParams(
            dimension_semantics=("parallel", "arbitrary"),
            vmem_limit_bytes=48 * 1024 * 1024,
        ),
    )(hidden_p, table_p)
    # TODO(synk): optional v7x-only item-axis split across both TensorCores
    # (needs an explicit index tie-breaking merge of the two partial top-k's).
    return out[:B]


if __name__ == "__main__":
    key = jax.random.PRNGKey(0)
    B, L, H, N, K = 8, 8, 32, 512, 5

    k1, k2, k3 = jax.random.split(key, 3)
    item_embedding = jax.random.normal(k1, (N, H), dtype=jnp.float32) * 0.1
    item_seq = jax.random.randint(k2, (B, L), 0, N, dtype=jnp.int32)
    item_seq_len = jax.random.randint(k3, (B,), 1, L + 1, dtype=jnp.int32)

    # tile_n=128 -> 4 item tiles, exercising the running top-k merge.
    idx = topk_decorator_forward(item_seq, item_seq_len, item_embedding, K,
                                 tile_n=128)
    idx = jax.block_until_ready(idx)

    # Reference in plain JAX with the same bf16-operand / f32-accum matmul.
    emb = item_embedding[item_seq]
    pos = jnp.arange(L, dtype=jnp.int32)[None, :]
    mask = (pos < item_seq_len[:, None]).astype(jnp.float32)
    denom = jnp.maximum(item_seq_len.astype(jnp.float32), 1.0)[:, None]
    hidden = jnp.einsum("blh,bl->bh", emb, mask) / denom
    scores = lax.dot_general(
        hidden.astype(jnp.bfloat16), item_embedding.astype(jnp.bfloat16),
        dimension_numbers=(((1,), (1,)), ((), ())),
        preferred_element_type=jnp.float32)
    _, ref_idx = lax.top_k(scores, K)
    ref_idx = ref_idx.astype(jnp.int32)

    if not jnp.array_equal(idx, ref_idx):
        # Tolerate index swaps only where the underlying scores are equal
        # to within rounding (near-ties).
        kr = jnp.take_along_axis(scores, idx, axis=-1)
        rr = jnp.take_along_axis(scores, ref_idx, axis=-1)
        assert jnp.allclose(kr, rr, rtol=0.0, atol=1e-4), (idx, ref_idx)
    print("KERNEL_OK")
</pallas_src>

<mosaic_0001>
module attributes {stable_mosaic.version = 11 : i64} {
  func.func @_topk_kernel(%arg0: i32, %arg1: i32, %arg2: memref<16x32xbf16, #tpu.memory_space<vmem>>, %arg3: memref<32x128xbf16, #tpu.memory_space<vmem>>, %arg4: memref<16x5xi32, #tpu.memory_space<vmem>>, %arg5: memref<16x128xf32, #tpu.memory_space<vmem>>, %arg6: memref<16x128xi32, #tpu.memory_space<vmem>>) attributes {dimension_semantics = [#tpu.dimension_semantics<parallel>, #tpu.dimension_semantics<arbitrary>], iteration_bounds = array<i64: 1, 4>, scalar_prefetch = 0 : i64, scratch_operands = 2 : i64, tpu.core_type = #tpu.core_type<tc>, window_params = [{transform_indices = @transform_0, window_bounds = array<i64: 16, 32>}, {transform_indices = @transform_1, window_bounds = array<i64: 32, 128>}, {transform_indices = @transform_2, window_bounds = array<i64: 16, 5>}]} {
    %c0_i32 = arith.constant 0 : i32
    %0 = arith.cmpi eq, %arg1, %c0_i32 : i32
    %1 = arith.extui %0 : i1 to i32
    %cst = arith.constant 0xFF800000 : f32
    %c2147483647_i32 = arith.constant 2147483647 : i32
    %c0_i32_0 = arith.constant 0 : i32
    %2 = arith.cmpi ne, %1, %c0_i32_0 : i32
    scf.if %2 {
      %120 = vector.broadcast %cst : f32 to vector<16x128xf32>
      %c0_38 = arith.constant 0 : index
      %c0_39 = arith.constant 0 : index
      %121 = vector.load %arg5[%c0_38, %c0_39] : memref<16x128xf32, #tpu.memory_space<vmem>>, vector<16x128xf32>
      tpu.vector_store %arg5[%c0_38, %c0_39], %120 {strides = array<i32>} : memref<16x128xf32, #tpu.memory_space<vmem>>, vector<16x128xf32>,
      %122 = vector.broadcast %c2147483647_i32 : i32 to vector<16x128xi32>
      %c0_40 = arith.constant 0 : index
      %c0_41 = arith.constant 0 : index
      %123 = vector.load %arg6[%c0_40, %c0_41] : memref<16x128xi32, #tpu.memory_space<vmem>>, vector<16x128xi32>
      tpu.vector_store %arg6[%c0_40, %c0_41], %122 {strides = array<i32>} : memref<16x128xi32, #tpu.memory_space<vmem>>, vector<16x128xi32>,
    } else {
    }
    %c0 = arith.constant 0 : index
    %c0_1 = arith.constant 0 : index
    %3 = vector.load %arg2[%c0, %c0_1] : memref<16x32xbf16, #tpu.memory_space<vmem>>, vector<16x32xbf16>
    %c0_2 = arith.constant 0 : index
    %c0_3 = arith.constant 0 : index
    %4 = vector.load %arg3[%c0_2, %c0_3] : memref<32x128xbf16, #tpu.memory_space<vmem>>, vector<32x128xbf16>
    %cst_4 = arith.constant dense<0.000000e+00> : vector<16x128xf32>
    %5 = tpu.matmul %3, %4, %cst_4 {dimension_numbers = #tpu.dot_dimension_numbers<[1], [0], [0], [1], [0, 0, 1, 1], [], []>} : vector<16x32xbf16>, vector<32x128xbf16>, vector<16x128xf32> -> vector<16x128xf32>
    %6 = tpu.iota {dimensions = array<i32: 1>} : vector<1x128xi32>
    %c128_i32 = arith.constant 128 : i32
    %7 = arith.muli %arg1, %c128_i32 : i32
    %c0_i32_5 = arith.constant 0 : i32
    %8 = arith.addi %7, %c0_i32_5 : i32
    %9 = vector.broadcast %8 : i32 to vector<1x128xi32>
    %10 = arith.addi %9, %6 : vector<1x128xi32>
    %c0_6 = arith.constant 0 : index
    %c0_7 = arith.constant 0 : index
    %11 = vector.load %arg5[%c0_6, %c0_7] : memref<16x128xf32, #tpu.memory_space<vmem>>, vector<16x128xf32>
    %c0_8 = arith.constant 0 : index
    %c0_9 = arith.constant 0 : index
    %12 = vector.load %arg6[%c0_8, %c0_9] : memref<16x128xi32, #tpu.memory_space<vmem>>, vector<16x128xi32>
    %13 = arith.cmpf ogt, %5, %11 : vector<16x128xf32>
    %14 = arith.select %13, %5, %11 : vector<16x128xi1>, vector<16x128xf32>
    %15 = vector.shape_cast %10 : vector<1x128xi32> to vector<1x128xi32>
    %16 = vector.broadcast %15 : vector<1x128xi32> to vector<16x128xi32>
    %17 = arith.select %13, %16, %12 : vector<16x128xi1>, vector<16x128xi32>
    %cst_10 = arith.constant dense<0xFF800000> : vector<16xf32>
    %18 = vector.multi_reduction <maximumf>, %14, %cst_10 [1] : vector<16x128xf32> to vector<16xf32>
    %19 = vector.shape_cast %18 : vector<16xf32> to vector<16x1xf32>
    %20 = vector.broadcast %19 : vector<16x1xf32> to vector<16x128xf32>
    %21 = arith.cmpf oeq, %14, %20 : vector<16x128xf32>
    %c2147483647_i32_11 = arith.constant 2147483647 : i32
    %22 = vector.broadcast %c2147483647_i32_11 : i32 to vector<16x128xi32>
    %23 = arith.select %21, %17, %22 : vector<16x128xi1>, vector<16x128xi32>
    %cst_12 = arith.constant dense<2147483647> : vector<16xi32>
    %24 = vector.multi_reduction <minsi>, %23, %cst_12 [1] : vector<16x128xi32> to vector<16xi32>
    %25 = vector.shape_cast %24 : vector<16xi32> to vector<16x1xi32>
    %26 = vector.broadcast %25 : vector<16x1xi32> to vector<16x128xi32>
    %27 = arith.cmpi eq, %12, %26 : vector<16x128xi32>
    %cst_13 = arith.constant 0xFF800000 : f32
    %28 = vector.broadcast %cst_13 : f32 to vector<16x128xf32>
    %29 = arith.select %27, %28, %11 : vector<16x128xi1>, vector<16x128xf32>
    %30 = vector.broadcast %10 : vector<1x128xi32> to vector<16x128xi32>
    %31 = vector.broadcast %25 : vector<16x1xi32> to vector<16x128xi32>
    %32 = arith.cmpi eq, %30, %31 : vector<16x128xi32>
    %cst_14 = arith.constant 0xFF800000 : f32
    %33 = vector.broadcast %cst_14 : f32 to vector<16x128xf32>
    %34 = arith.select %32, %33, %5 : vector<16x128xi1>, vector<16x128xf32>
    %35 = arith.cmpf ogt, %34, %29 : vector<16x128xf32>
    %36 = arith.select %35, %34, %29 : vector<16x128xi1>, vector<16x128xf32>
    %37 = vector.shape_cast %10 : vector<1x128xi32> to vector<1x128xi32>
    %38 = vector.broadcast %37 : vector<1x128xi32> to vector<16x128xi32>
    %39 = arith.select %35, %38, %12 : vector<16x128xi1>, vector<16x128xi32>
    %cst_15 = arith.constant dense<0xFF800000> : vector<16xf32>
    %40 = vector.multi_reduction <maximumf>, %36, %cst_15 [1] : vector<16x128xf32> to vector<16xf32>
    %41 = vector.shape_cast %40 : vector<16xf32> to vector<16x1xf32>
    %42 = vector.broadcast %41 : vector<16x1xf32> to vector<16x128xf32>
    %43 = arith.cmpf oeq, %36, %42 : vector<16x128xf32>
    %c2147483647_i32_16 = arith.constant 2147483647 : i32
    %44 = vector.broadcast %c2147483647_i32_16 : i32 to vector<16x128xi32>
    %45 = arith.select %43, %39, %44 : vector<16x128xi1>, vector<16x128xi32>
    %cst_17 = arith.constant dense<2147483647> : vector<16xi32>
    %46 = vector.multi_reduction <minsi>, %45, %cst_17 [1] : vector<16x128xi32> to vector<16xi32>
    %47 = vector.shape_cast %46 : vector<16xi32> to vector<16x1xi32>
    %48 = vector.broadcast %47 : vector<16x1xi32> to vector<16x128xi32>
    %49 = arith.cmpi eq, %12, %48 : vector<16x128xi32>
    %cst_18 = arith.constant 0xFF800000 : f32
    %50 = vector.broadcast %cst_18 : f32 to vector<16x128xf32>
    %51 = arith.select %49, %50, %29 : vector<16x128xi1>, vector<16x128xf32>
    %52 = vector.broadcast %10 : vector<1x128xi32> to vector<16x128xi32>
    %53 = vector.broadcast %47 : vector<16x1xi32> to vector<16x128xi32>
    %54 = arith.cmpi eq, %52, %53 : vector<16x128xi32>
    %cst_19 = arith.constant 0xFF800000 : f32
    %55 = vector.broadcast %cst_19 : f32 to vector<16x128xf32>
    %56 = arith.select %54, %55, %34 : vector<16x128xi1>, vector<16x128xf32>
    %57 = arith.cmpf ogt, %56, %51 : vector<16x128xf32>
    %58 = arith.select %57, %56, %51 : vector<16x128xi1>, vector<16x128xf32>
    %59 = vector.shape_cast %10 : vector<1x128xi32> to vector<1x128xi32>
    %60 = vector.broadcast %59 : vector<1x128xi32> to vector<16x128xi32>
    %61 = arith.select %57, %60, %12 : vector<16x128xi1>, vector<16x128xi32>
    %cst_20 = arith.constant dense<0xFF800000> : vector<16xf32>
    %62 = vector.multi_reduction <maximumf>, %58, %cst_20 [1] : vector<16x128xf32> to vector<16xf32>
    %63 = vector.shape_cast %62 : vector<16xf32> to vector<16x1xf32>
    %64 = vector.broadcast %63 : vector<16x1xf32> to vector<16x128xf32>
    %65 = arith.cmpf oeq, %58, %64 : vector<16x128xf32>
    %c2147483647_i32_21 = arith.constant 2147483647 : i32
    %66 = vector.broadcast %c2147483647_i32_21 : i32 to vector<16x128xi32>
    %67 = arith.select %65, %61, %66 : vector<16x128xi1>, vector<16x128xi32>
    %cst_22 = arith.constant dense<2147483647> : vector<16xi32>
    %68 = vector.multi_reduction <minsi>, %67, %cst_22 [1] : vector<16x128xi32> to vector<16xi32>
    %69 = vector.shape_cast %68 : vector<16xi32> to vector<16x1xi32>
    %70 = vector.broadcast %69 : vector<16x1xi32> to vector<16x128xi32>
    %71 = arith.cmpi eq, %12, %70 : vector<16x128xi32>
    %cst_23 = arith.constant 0xFF800000 : f32
    %72 = vector.broadcast %cst_23 : f32 to vector<16x128xf32>
    %73 = arith.select %71, %72, %51 : vector<16x128xi1>, vector<16x128xf32>
    %74 = vector.broadcast %10 : vector<1x128xi32> to vector<16x128xi32>
    %75 = vector.broadcast %69 : vector<16x1xi32> to vector<16x128xi32>
    %76 = arith.cmpi eq, %74, %75 : vector<16x128xi32>
    %cst_24 = arith.constant 0xFF800000 : f32
    %77 = vector.broadcast %cst_24 : f32 to vector<16x128xf32>
    %78 = arith.select %76, %77, %56 : vector<16x128xi1>, vector<16x128xf32>
    %79 = arith.cmpf ogt, %78, %73 : vector<16x128xf32>
    %80 = arith.select %79, %78, %73 : vector<16x128xi1>, vector<16x128xf32>
    %81 = vector.shape_cast %10 : vector<1x128xi32> to vector<1x128xi32>
    %82 = vector.broadcast %81 : vector<1x128xi32> to vector<16x128xi32>
    %83 = arith.select %79, %82, %12 : vector<16x128xi1>, vector<16x128xi32>
    %cst_25 = arith.constant dense<0xFF800000> : vector<16xf32>
    %84 = vector.multi_reduction <maximumf>, %80, %cst_25 [1] : vector<16x128xf32> to vector<16xf32>
    %85 = vector.shape_cast %84 : vector<16xf32> to vector<16x1xf32>
    %86 = vector.broadcast %85 : vector<16x1xf32> to vector<16x128xf32>
    %87 = arith.cmpf oeq, %80, %86 : vector<16x128xf32>
    %c2147483647_i32_26 = arith.constant 2147483647 : i32
    %88 = vector.broadcast %c2147483647_i32_26 : i32 to vector<16x128xi32>
    %89 = arith.select %87, %83, %88 : vector<16x128xi1>, vector<16x128xi32>
    %cst_27 = arith.constant dense<2147483647> : vector<16xi32>
    %90 = vector.multi_reduction <minsi>, %89, %cst_27 [1] : vector<16x128xi32> to vector<16xi32>
    %91 = vector.shape_cast %90 : vector<16xi32> to vector<16x1xi32>
    %92 = vector.broadcast %91 : vector<16x1xi32> to vector<16x128xi32>
    %93 = arith.cmpi eq, %12, %92 : vector<16x128xi32>
    %cst_28 = arith.constant 0xFF800000 : f32
    %94 = vector.broadcast %cst_28 : f32 to vector<16x128xf32>
    %95 = arith.select %93, %94, %73 : vector<16x128xi1>, vector<16x128xf32>
    %96 = vector.broadcast %10 : vector<1x128xi32> to vector<16x128xi32>
    %97 = vector.broadcast %91 : vector<16x1xi32> to vector<16x128xi32>
    %98 = arith.cmpi eq, %96, %97 : vector<16x128xi32>
    %cst_29 = arith.constant 0xFF800000 : f32
    %99 = vector.broadcast %cst_29 : f32 to vector<16x128xf32>
    %100 = arith.select %98, %99, %78 : vector<16x128xi1>, vector<16x128xf32>
    %101 = arith.cmpf ogt, %100, %95 : vector<16x128xf32>
    %102 = arith.select %101, %100, %95 : vector<16x128xi1>, vector<16x128xf32>
    %103 = vector.shape_cast %10 : vector<1x128xi32> to vector<1x128xi32>
    %104 = vector.broadcast %103 : vector<1x128xi32> to vector<16x128xi32>
    %105 = arith.select %101, %104, %12 : vector<16x128xi1>, vector<16x128xi32>
    %cst_30 = arith.constant dense<0xFF800000> : vector<16xf32>
    %106 = vector.multi_reduction <maximumf>, %102, %cst_30 [1] : vector<16x128xf32> to vector<16xf32>
    %107 = vector.shape_cast %106 : vector<16xf32> to vector<16x1xf32>
    %108 = vector.broadcast %107 : vector<16x1xf32> to vector<16x128xf32>
    %109 = arith.cmpf oeq, %102, %108 : vector<16x128xf32>
    %c2147483647_i32_31 = arith.constant 2147483647 : i32
    %110 = vector.broadcast %c2147483647_i32_31 : i32 to vector<16x128xi32>
    %111 = arith.select %109, %105, %110 : vector<16x128xi1>, vector<16x128xi32>
    %cst_32 = arith.constant dense<2147483647> : vector<16xi32>
    %112 = vector.multi_reduction <minsi>, %111, %cst_32 [1] : vector<16x128xi32> to vector<16xi32>
    %113 = vector.shape_cast %112 : vector<16xi32> to vector<16x1xi32>
    %c3_i32 = arith.constant 3 : i32
    %114 = arith.cmpi ne, %arg1, %c3_i32 : i32
    %115 = arith.extui %114 : i1 to i32
    %cst_33 = arith.constant 0xFF800000 : f32
    %c2147483647_i32_34 = arith.constant 2147483647 : i32
    %c0_i32_35 = arith.constant 0 : i32
    %116 = arith.cmpi ne, %115, %c0_i32_35 : i32
    scf.if %116 {
      %120 = vector.broadcast %cst_33 : f32 to vector<16x128xf32>
      %121 = vector.broadcast %c2147483647_i32_34 : i32 to vector<16x128xi32>
      %c0_i32_38 = arith.constant 0 : i32
      %122 = vector.broadcast %c0_i32_38 : i32 to vector<1x128xi32>
      %123 = arith.cmpi eq, %6, %122 : vector<1x128xi32>
      %124 = vector.shape_cast %123 : vector<1x128xi1> to vector<1x128xi1>
      %125 = vector.broadcast %124 : vector<1x128xi1> to vector<16x128xi1>
      %126 = vector.shape_cast %19 : vector<16x1xf32> to vector<16x1xf32>
      %127 = vector.broadcast %126 : vector<16x1xf32> to vector<16x128xf32>
      %128 = arith.select %125, %127, %120 : vector<16x128xi1>, vector<16x128xf32>
      %129 = vector.shape_cast %123 : vector<1x128xi1> to vector<1x128xi1>
      %130 = vector.broadcast %129 : vector<1x128xi1> to vector<16x128xi1>
      %131 = vector.shape_cast %25 : vector<16x1xi32> to vector<16x1xi32>
      %132 = vector.broadcast %131 : vector<16x1xi32> to vector<16x128xi32>
      %133 = arith.select %130, %132, %121 : vector<16x128xi1>, vector<16x128xi32>
      %c1_i32 = arith.constant 1 : i32
      %134 = vector.broadcast %c1_i32 : i32 to vector<1x128xi32>
      %135 = arith.cmpi eq, %6, %134 : vector<1x128xi32>
      %136 = vector.shape_cast %135 : vector<1x128xi1> to vector<1x128xi1>
      %137 = vector.broadcast %136 : vector<1x128xi1> to vector<16x128xi1>
      %138 = vector.shape_cast %41 : vector<16x1xf32> to vector<16x1xf32>
      %139 = vector.broadcast %138 : vector<16x1xf32> to vector<16x128xf32>
      %140 = arith.select %137, %139, %128 : vector<16x128xi1>, vector<16x128xf32>
      %141 = vector.shape_cast %135 : vector<1x128xi1> to vector<1x128xi1>
      %142 = vector.broadcast %141 : vector<1x128xi1> to vector<16x128xi1>
      %143 = vector.shape_cast %47 : vector<16x1xi32> to vector<16x1xi32>
      %144 = vector.broadcast %143 : vector<16x1xi32> to vector<16x128xi32>
      %145 = arith.select %142, %144, %133 : vector<16x128xi1>, vector<16x128xi32>
      %c2_i32 = arith.constant 2 : i32
      %146 = vector.broadcast %c2_i32 : i32 to vector<1x128xi32>
      %147 = arith.cmpi eq, %6, %146 : vector<1x128xi32>
      %148 = vector.shape_cast %147 : vector<1x128xi1> to vector<1x128xi1>
      %149 = vector.broadcast %148 : vector<1x128xi1> to vector<16x128xi1>
      %150 = vector.shape_cast %63 : vector<16x1xf32> to vector<16x1xf32>
      %151 = vector.broadcast %150 : vector<16x1xf32> to vector<16x128xf32>
      %152 = arith.select %149, %151, %140 : vector<16x128xi1>, vector<16x128xf32>
      %153 = vector.shape_cast %147 : vector<1x128xi1> to vector<1x128xi1>
      %154 = vector.broadcast %153 : vector<1x128xi1> to vector<16x128xi1>
      %155 = vector.shape_cast %69 : vector<16x1xi32> to vector<16x1xi32>
      %156 = vector.broadcast %155 : vector<16x1xi32> to vector<16x128xi32>
      %157 = arith.select %154, %156, %145 : vector<16x128xi1>, vector<16x128xi32>
      %c3_i32_39 = arith.constant 3 : i32
      %158 = vector.broadcast %c3_i32_39 : i32 to vector<1x128xi32>
      %159 = arith.cmpi eq, %6, %158 : vector<1x128xi32>
      %160 = vector.shape_cast %159 : vector<1x128xi1> to vector<1x128xi1>
      %161 = vector.broadcast %160 : vector<1x128xi1> to vector<16x128xi1>
      %162 = vector.shape_cast %85 : vector<16x1xf32> to vector<16x1xf32>
      %163 = vector.broadcast %162 : vector<16x1xf32> to vector<16x128xf32>
      %164 = arith.select %161, %163, %152 : vector<16x128xi1>, vector<16x128xf32>
      %165 = vector.shape_cast %159 : vector<1x128xi1> to vector<1x128xi1>
      %166 = vector.broadcast %165 : vector<1x128xi1> to vector<16x128xi1>
      %167 = vector.shape_cast %91 : vector<16x1xi32> to vector<16x1xi32>
      %168 = vector.broadcast %167 : vector<16x1xi32> to vector<16x128xi32>
      %169 = arith.select %166, %168, %157 : vector<16x128xi1>, vector<16x128xi32>
      %c4_i32 = arith.constant 4 : i32
      %170 = vector.broadcast %c4_i32 : i32 to vector<1x128xi32>
      %171 = arith.cmpi eq, %6, %170 : vector<1x128xi32>
      %172 = vector.shape_cast %171 : vector<1x128xi1> to vector<1x128xi1>
      %173 = vector.broadcast %172 : vector<1x128xi1> to vector<16x128xi1>
      %174 = vector.shape_cast %107 : vector<16x1xf32> to vector<16x1xf32>
      %175 = vector.broadcast %174 : vector<16x1xf32> to vector<16x128xf32>
      %176 = arith.select %173, %175, %164 : vector<16x128xi1>, vector<16x128xf32>
      %177 = vector.shape_cast %171 : vector<1x128xi1> to vector<1x128xi1>
      %178 = vector.broadcast %177 : vector<1x128xi1> to vector<16x128xi1>
      %179 = vector.shape_cast %113 : vector<16x1xi32> to vector<16x1xi32>
      %180 = vector.broadcast %179 : vector<16x1xi32> to vector<16x128xi32>
      %181 = arith.select %178, %180, %169 : vector<16x128xi1>, vector<16x128xi32>
      %c0_40 = arith.constant 0 : index
      %c0_41 = arith.constant 0 : index
      %182 = vector.load %arg5[%c0_40, %c0_41] : memref<16x128xf32, #tpu.memory_space<vmem>>, vector<16x128xf32>
      tpu.vector_store %arg5[%c0_40, %c0_41], %176 {strides = array<i32>} : memref<16x128xf32, #tpu.memory_space<vmem>>, vector<16x128xf32>,
      %c0_42 = arith.constant 0 : index
      %c0_43 = arith.constant 0 : index
      %183 = vector.load %arg6[%c0_42, %c0_43] : memref<16x128xi32, #tpu.memory_space<vmem>>, vector<16x128xi32>
      tpu.vector_store %arg6[%c0_42, %c0_43], %181 {strides = array<i32>} : memref<16x128xi32, #tpu.memory_space<vmem>>, vector<16x128xi32>,
    } else {
    }
    %c3_i32_36 = arith.constant 3 : i32
    %117 = arith.cmpi eq, %arg1, %c3_i32_36 : i32
    %118 = arith.extui %117 : i1 to i32
    %c0_i32_37 = arith.constant 0 : i32
    %119 = arith.cmpi ne, %118, %c0_i32_37 : i32
    scf.if %119 {
      %120 = tpu.concatenate %25, %47, %69, %91, %113 in 1 : vector<16x1xi32>, vector<16x1xi32>, vector<16x1xi32>, vector<16x1xi32>, vector<16x1xi32> -> vector<16x5xi32>
      %c0_38 = arith.constant 0 : index
      %c0_39 = arith.constant 0 : index
      %121 = vector.load %arg4[%c0_38, %c0_39] : memref<16x5xi32, #tpu.memory_space<vmem>>, vector<16x5xi32>
      tpu.vector_store %arg4[%c0_38, %c0_39], %120 {strides = array<i32>} : memref<16x5xi32, #tpu.memory_space<vmem>>, vector<16x5xi32>,
    } else {
    }
    return
  }
  func.func @transform_0(%arg0: i32, %arg1: i32) -> (i32, i32) {
    %c0_i32 = arith.constant 0 : i32
    %c0_i32_0 = arith.constant 0 : i32
    return %arg0, %c0_i32 : i32, i32
  }
  func.func @transform_1(%arg0: i32, %arg1: i32) -> (i32, i32) {
    %c0_i32 = arith.constant 0 : i32
    %c0_i32_0 = arith.constant 0 : i32
    return %c0_i32, %arg1 : i32, i32
  }
  func.func @transform_2(%arg0: i32, %arg1: i32) -> (i32, i32) {
    %c0_i32 = arith.constant 0 : i32
    %c0_i32_0 = arith.constant 0 : i32
    return %arg0, %c0_i32 : i32, i32
  }
}

</mosaic_0001>

<llo_original>
// kernel: tpu_custom_call.1
$region0: #{tpu_custom_call.1}
  #allocation0 [shape = 'u32[]', space=smem, size = 0x4, offset = 0x4, fixed_abs, tag = 'smem constant byte address 0x4 - core index']
  #allocation1 [shape = 'u32[144,128]{1,0:T(1,128)}', space=vmem, size = 0x12000, scoped, tag = 'internal scratch']
  #allocation2 [shape = 'f32[16,128]{1,0:T(8,128)}', space=vmem, size = 0x2000, scoped, tag = 'scratch operand']
  #allocation3 [shape = 's32[16,128]{1,0:T(8,128)}', space=vmem, size = 0x2000, scoped, tag = 'scratch operand']
  %s0 = inlined_call_operand.hbm [shape: bf16[16,32], index: 0, kind: input, shape index: {}]
  %s1 = inlined_call_operand.hbm [shape: bf16[32,512], index: 1, kind: input, shape index: {}]
  %s2 = inlined_call_operand.vmem [shape: s32[16,5], index: 2, kind: output, shape index: {}]
  %s3 = sld [smem:[#allocation0]]
  $region61: #{tpu_custom_call.1} parent=0
    _
  %s5 = ssub.s32 1, %s3
  %s6 = scalar_select 0, %s5, %s3
  $region1: #{tpu_custom_call.1} parent=0
    #allocation4 [shape = 'u8[4096]{0}', space=vmem, size = 0x1000, scoped, tag = 'input window, operand 0, single buffered']
    #allocation5 [shape = 's32[2]{0}', space=sflag, size = 0x8, scoped, tag = 'scoped memory for tpu_custom_call.1']
    #allocation6 [shape = 'u8[16384]{0}', space=vmem, size = 0x4000, scoped, tag = 'input window, operand 1']
    #allocation7 [shape = 's32[2]{0}', space=sflag, size = 0x8, scoped, tag = 'scoped memory for tpu_custom_call.1']
    %7 = vsyncpa [#allocation5], 0
    %8 = vsyncpa [#allocation7], 0
    %s9 = scalar_lea.sflag [#allocation7], 1
    %10 = vsyncpa %s9, 0
    loop: start=0, step=1, limit=6
    $region2: #{tpu_custom_call.1} parent=1 // loop_pre_header
      _
    $region3: #{tpu_custom_call.1} parent=1 // loop_header
      %s12 = sphi 0, %s16
      %p13 = scmp.ge.s32.totalorder %s12, 6
      %s19 = sphi 0, %s31
      %s20 = sphi 0, %s27
      %s21 = sphi 0, %s19
      %s22 = sphi 0, %s20
      %s23 = sphi 0, %s21
      %s24 = sphi 0, %s22
      %s34 = sphi 0, %s36
      %s37 = sphi 0, %s34
      %s38 = sphi 0, %s37
      %s54 = sphi 0, %s38
      %s60 = sphi 0, %s62
      %s63 = sphi 0, %s60
      %s64 = sphi 0, %s63
      %s80 = sphi 0, %s64
      %s86 = sphi 0, %s88
      %s89 = sphi 0, %s86
      %s90 = sphi 0, %s89
      %s106 = sphi 0, %s90
    $region4: #{tpu_custom_call.1} parent=1 // loop_header_branch
      %15 = sbr.rel (%p13) target = $region8
    $region5: #{tpu_custom_call.1} parent=1 // loop_body
      %s17 = ssub.s32 %s12, 1
      %s18 = ssub.s32 %s12, 2
      %s25 = sadd.s32 1, %s20
      %p26 = scmp.ge.s32.totalorder %s25, 4
      %s27 = scalar_select %p26, 0, %s25
      %s28 = sadd.s32 1, %s19
      %s29 = scalar_select %p26, %s28, %s19
      %p30 = scmp.ge.s32.totalorder %s29, 1
      %s31 = scalar_select %p30, 0, %s29
      %s32 = ssub.s32 %s19, %s31
      %p33 = scmp.eq.s32.totalorder %s32, 0
      %s35 = sadd.s32 %s34, 1
      %s36 = scalar_select %p33, %s34, %s35
      %p39 = pneg %p33
      %p40 = scmp.eq.s32.totalorder %s12, 3
      %p41 = por %p39, %p40
      %p42 = scmp.ne.s32.totalorder %s34, %s37
      %p43 = scmp.eq.s32.totalorder %s12, 0
      %p44 = por %p42, %p43
      %p45 = scmp.ne.s32.totalorder %s34, %s37
      %p46 = scmp.eq.s32.totalorder %s17, 3
      %p47 = por %p45, %p46
      %p48 = scmp.ne.s32.totalorder %s37, %s38
      %p49 = scmp.eq.s32.totalorder %s17, 0
      %p50 = por %p48, %p49
      %p51 = scmp.ne.s32.totalorder %s37, %s38
      %p52 = scmp.eq.s32.totalorder %s18, 3
      %p53 = por %p51, %p52
      %p55 = scmp.ne.s32.totalorder %s38, %s54
      %p56 = scmp.eq.s32.totalorder %s18, 0
      %p57 = por %p55, %p56
      %s58 = ssub.s32 %s20, %s27
      %p59 = scmp.eq.s32.totalorder %s58, 0
      %s61 = sadd.s32 %s60, 1
      %s62 = scalar_select %p59, %s60, %s61
      %p65 = pneg %p59
      %p66 = scmp.eq.s32.totalorder %s12, 3
      %p67 = por %p65, %p66
      %p68 = scmp.ne.s32.totalorder %s60, %s63
      %p69 = scmp.eq.s32.totalorder %s12, 0
      %p70 = por %p68, %p69
      %p71 = scmp.ne.s32.totalorder %s60, %s63
      %p72 = scmp.eq.s32.totalorder %s17, 3
      %p73 = por %p71, %p72
      %p74 = scmp.ne.s32.totalorder %s63, %s64
      %p75 = scmp.eq.s32.totalorder %s17, 0
      %p76 = por %p74, %p75
      %p77 = scmp.ne.s32.totalorder %s63, %s64
      %p78 = scmp.eq.s32.totalorder %s18, 3
      %p79 = por %p77, %p78
      %p81 = scmp.ne.s32.totalorder %s64, %s80
      %p82 = scmp.eq.s32.totalorder %s18, 0
      %p83 = por %p81, %p82
      %s84 = ssub.s32 %s19, %s31
      %p85 = scmp.eq.s32.totalorder %s84, 0
      %s87 = sadd.s32 %s86, 1
      %s88 = scalar_select %p85, %s86, %s87
      %p91 = pneg %p85
      %p92 = scmp.eq.s32.totalorder %s12, 3
      %p93 = por %p91, %p92
      %p94 = scmp.ne.s32.totalorder %s86, %s89
      %p95 = scmp.eq.s32.totalorder %s12, 0
      %p96 = por %p94, %p95
      %p97 = scmp.ne.s32.totalorder %s86, %s89
      %p98 = scmp.eq.s32.totalorder %s17, 3
      %p99 = por %p97, %p98
      %p100 = scmp.ne.s32.totalorder %s89, %s90
      %p101 = scmp.eq.s32.totalorder %s17, 0
      %p102 = por %p100, %p101
      %p103 = scmp.ne.s32.totalorder %s89, %s90
      %p104 = scmp.eq.s32.totalorder %s18, 3
      %p105 = por %p103, %p104
      %p107 = scmp.ne.s32.totalorder %s90, %s106
      %p108 = scmp.eq.s32.totalorder %s18, 0
      %p109 = por %p107, %p108
      %p110 = scmp.le.s32.totalorder 1, %s12
      %p111 = scmp.lt.s32.totalorder %s12, 5
      %p112 = pnand %p110, %p111
      %p113 = pneg %p112
      // Predicated region
      $region9: #{tpu_custom_call.1} parent=5 // pred_check
        _
      $region10: #{tpu_custom_call.1} parent=5 // pred_check_branch
        %115 = sbr.rel (%p112) target = $region12
      $region11: #{tpu_custom_call.1} parent=5 // pred_region
        %s116 = ssub.s32 %s12, 1
        // Predicated region
        $region13: #{tpu_custom_call.1} parent=11 // pred_check
          %p117 = pneg %p50
        $region14: #{tpu_custom_call.1} parent=11 // pred_check_branch
          %119 = sbr.rel (%p117) target = $region16
        $region15: #{tpu_custom_call.1} parent=11 // pred_region
          %s120 = smul.u32 2, %s21
          %s122 = ssub.s32 128, 128
          %123 = vsyncadd [#allocation5], %s122
          %s124 = smul.addr %s120, 64
          %s125 = scalar_lea.hbm %s0, %s124
          %s126 = sshll.u32 [#allocation4], 4
          %s127 = int_to_ptr.vmem [resolvable:$true] %s126
          %132 = dma.hbm_to_vmem [thread:$0]  %s125, 128, %s127, [#allocation5], 64, 64, 4
        $region16: #{tpu_custom_call.1} parent=11 // pred_fallthru
          _
      $region12: #{tpu_custom_call.1} parent=5 // pred_fallthru
        _
      %p133 = scmp.lt.s32.totalorder %s12, 4
      // Predicated region
      $region17: #{tpu_custom_call.1} parent=5 // pred_check
        %p134 = pneg %p133
      $region18: #{tpu_custom_call.1} parent=5 // pred_check_branch
        %136 = sbr.rel (%p134) target = $region20
      $region19: #{tpu_custom_call.1} parent=5 // pred_region
        // Predicated region
        $region21: #{tpu_custom_call.1} parent=19 // pred_check
          %p137 = pneg %p70
        $region22: #{tpu_custom_call.1} parent=19 // pred_check_branch
          %139 = sbr.rel (%p137) target = $region24
        $region23: #{tpu_custom_call.1} parent=19 // pred_region
          %s140 = sand.u32 %s60, 1
          %s141 = scalar_lea.sflag [#allocation7], %s140
          %s142 = sand.u32 %s60, 1
          %s143 = smul.addr %s142, 16
          %s144 = scalar_lea.vmem [#allocation6], %s143
          %s146 = ssub.s32 256, 256
          %147 = vsyncadd %s141, %s146
          %s148 = smul.addr %s20, 64
          %s149 = scalar_lea.hbm %s1, %s148
          %s150 = sshll.u32 %s144, 4
          %s151 = int_to_ptr.vmem [resolvable:$true] %s150
          %156 = dma.hbm_to_vmem [thread:$0]  %s149, 256, %s151, %s141, 256, 64, 4
        $region24: #{tpu_custom_call.1} parent=19 // pred_fallthru
          _
      $region20: #{tpu_custom_call.1} parent=5 // pred_fallthru
        _
      %p157 = scmp.le.s32.totalorder 1, %s12
      %p158 = scmp.lt.s32.totalorder %s12, 5
      %p159 = pnand %p157, %p158
      %p160 = pneg %p159
      // Predicated region
      $region25: #{tpu_custom_call.1} parent=5 // pred_check
        _
      $region26: #{tpu_custom_call.1} parent=5 // pred_check_branch
        %162 = sbr.rel (%p159) target = $region28
      $region27: #{tpu_custom_call.1} parent=5 // pred_region
        %s163 = ssub.s32 %s12, 1
        // Predicated region
        $region29: #{tpu_custom_call.1} parent=27 // pred_check
          %p164 = pneg %p50
        $region30: #{tpu_custom_call.1} parent=27 // pred_check_branch
          %166 = sbr.rel (%p164) target = $region32
        $region31: #{tpu_custom_call.1} parent=27 // pred_region
          %167 = dma.done [#allocation5], 128
        $region32: #{tpu_custom_call.1} parent=27 // pred_fallthru
          _
        %s168 = sand.u32 %s63, 1
        %s169 = scalar_lea.sflag [#allocation7], %s168
        %s170 = sand.u32 %s63, 1
        %s171 = smul.addr %s170, 16
        %s172 = scalar_lea.vmem [#allocation6], %s171
        // Predicated region
        $region33: #{tpu_custom_call.1} parent=27 // pred_check
          %p173 = pneg %p76
        $region34: #{tpu_custom_call.1} parent=27 // pred_check_branch
          %175 = sbr.rel (%p173) target = $region36
        $region35: #{tpu_custom_call.1} parent=27 // pred_region
          %176 = dma.done %s169, 256
        $region36: #{tpu_custom_call.1} parent=27 // pred_fallthru
          _
        %p177 = pneg %p50
        %p178 = pneg %p47
        %s179 = sand.u32 %s63, 1
        %s180 = scalar_lea.sflag [#allocation7], %s179
        %s181 = sand.u32 %s63, 1
        %s182 = smul.addr %s181, 16
        %s183 = scalar_lea.vmem [#allocation6], %s182
        %p184 = pneg %p76
        %p185 = pneg %p73
        %p186 = pneg %p102
        %p187 = pneg %p99
        %s188 = smul.u32 2, %s21
        %p189 = scmp.lt.s32.totalorder %s188, 1
        %s190 = scalar_select %p189, %s188, 1
        %s191 = smul.addr %s190, 8
        %s192 = scalar_lea.vmem %s2, %s191
        %s193 = smul.u32 2, %s21
        %s194 = smul.u32 2, %s21
        %p195 = scmp.lt.s32.totalorder %s194, 1
        %s196 = scalar_select %p195, %s194, 1
        %s197 = smul.addr %s196, 8
        %s198 = scalar_lea.vmem %s2, %s197
        %s199 = smul.u32 2, %s21
        %p201 = scmp.eq.s32.totalorder %s22, 0
        // Predicated region
        $region37: #{tpu_custom_call.1} parent=27 // pred_check
          %p202 = pneg %p201
        $region38: #{tpu_custom_call.1} parent=27 // pred_check_branch
          %204 = sbr.rel (%p202) target = $region40
        $region39: #{tpu_custom_call.1} parent=27 // pred_region
          %205 = vst [vmem:[#allocation2] sm:$0xff] -inf
          %206 = vst [vmem:[#allocation2 + $0x8] sm:$0xff] -inf
          %207 = vst [vmem:[#allocation3] sm:$0xff] 2147483647
          %208 = vst [vmem:[#allocation3 + $0x8] sm:$0xff] 2147483647
        $region40: #{tpu_custom_call.1} parent=27 // pred_fallthru
          _
        %v209 = vld [vmem:[#allocation4] sm:$0xf]
        %v210 = vld [vmem:[#allocation4 + $0x4] sm:$0xf]
        %v211 = vld [vmem:[%s172] sm:$0xf]
        %v212 = vld [vmem:[%s172 + $0x4] sm:$0xf]
        %v213 = vld [vmem:[%s172 + $0x8] sm:$0xf]
        %v214 = vld [vmem:[%s172 + $0xc] sm:$0xf]
        %v217 = vunpack.c.l.b16 %v209
        %v218 = vunpack.c.l.b16 %v210
        %v219 = vpack.c.b16 %v218, %v217
        %v224 = vunpack.c.l.b16 %v211
        %v225 = vunpack.c.l.b16 %v212
        %v226 = vunpack.c.l.b16 %v213
        %v227 = vunpack.c.l.b16 %v214
        %v228 = vpack.c.b16 %v225, %v224
        %v229 = vpack.c.b16 %v227, %v226
        %vm232 = vcmask 261120
        %v234 = vsel %vm232, %v219, 0
        %236 = vmatprep.subr.bf16.mxu0 0
        %237 = vmatpush1.bf16.msra.mxu0 0
        %238 = vmatprep.subr.bf16.mxu0 0
        %239 = vmatpush1.bf16.msra.mxu0 0
        %240 = vmatprep.subr.bf16.mxu0 0
        %241 = vmatpush1.bf16.msra.mxu0 0
        %242 = vmatprep.subr.bf16.mxu0 0
        %243 = vmatpush1.bf16.msra.mxu0 0
        %244 = vmatprep.subr.bf16.mxu0 0
        %245 = vmatpush1.bf16.msra.mxu0 0
        %246 = vmatprep.subr.bf16.mxu0 0
        %247 = vmatpush1.bf16.msra.mxu0 0
        %248 = vmatprep.subr.bf16.mxu0 0
        %249 = vmatpush1.bf16.msra.mxu0 %v229
        %250 = vmatprep.subr.bf16.mxu0 0
        %251 = vmatpush1.bf16.msra.mxu0 %v228
        %252 = vmatprep.subr.bf16.mxu0 0
        %253 = vmatpush2.bf16.msra.mxu0 0
        %254 = vmatprep.subr.bf16.mxu0 0
        %255 = vmatpush2.bf16.msra.mxu0 0
        %256 = vmatprep.subr.bf16.mxu0 0
        %257 = vmatpush2.bf16.msra.mxu0 0
        %258 = vmatprep.subr.bf16.mxu0 0
        %259 = vmatpush2.bf16.msra.mxu0 0
        %260 = vmatprep.subr.bf16.mxu0 0
        %261 = vmatpush2.bf16.msra.mxu0 0
        %262 = vmatprep.subr.bf16.mxu0 0
        %263 = vmatpush2.bf16.msra.mxu0 0
        %264 = vmatprep.subr.bf16.mxu0 0
        %265 = vmatpush2.bf16.msra.mxu0 0
        %266 = vmatprep.subr.bf16.mxu0 0
        %267 = vmatpush2.bf16.msra.mxu0 0
        %268 = vmatprep.mubr.bf16.mxu0 0
        %269 = vmatmul.mubr.bf16.gmra.mxu0 %v234
        %v270 = vpop.f32.mrf.mxu0
        %v271 = vadd.f32 0.0, %v270
        %v272 = vpop.f32.mrf.mxu0
        %v273 = vpop.f32.mrf.mxu0
        %v274 = vadd.f32 0.0, %v273
        %v275 = vpop.f32.mrf.mxu0
        %276 = vdwg.mxu0
        %v277 = vlaneseq
        %v278 = vand.u32 %v277, 127
        %s279 = smul.u32 %s22, 128
        %v280 = vstv %s279
        %v281 = vadd.s32 %v280, %v278
        %v282 = vld [vmem:[#allocation2] sm:$0xff]
        %v283 = vld [vmem:[#allocation2 + $0x8] sm:$0xff]
        %v284 = vld [vmem:[#allocation3] sm:$0xff]
        %v285 = vld [vmem:[#allocation3 + $0x8] sm:$0xff]
        %vm286 = vcmp.gt.f32.partialorder %v271, %v282
        %vm287 = vcmp.gt.f32.partialorder %v274, %v283
        %v288 = vsel %vm286, %v271, %v282
        %v289 = vsel %vm287, %v274, %v283
        %v290 = vsel %vm286, %v281, %v284
        %v291 = vsel %vm287, %v281, %v285
        %292 = vmax.xlane.f32.xlu0 %v288
        %v293 = vpop.xlane.xlu0 %292
        %294 = vmax.xlane.f32.xlu0 %v289
        %v295 = vpop.xlane.xlu0 %294
        %vm296 = vcmp.eq.f32.partialorder %v288, %v293
        %vm297 = vcmp.eq.f32.partialorder %v289, %v295
        %v298 = vsel %vm296, %v290, 2147483647
        %v299 = vsel %vm297, %v291, 2147483647
        %v300 = vand.u32 %v298, 65535
        %v301 = vshra.s32 %v298, 16
        %v302 = vcvt.s32.f32 %v300
        %v303 = vcvt.s32.f32 %v301
        %304 = vmin.xlane.f32.xlu0 %v303
        %v305 = vpop.xlane.xlu0 %304
        %vm306 = vcmp.eq.f32.partialorder %v303, %v305
        %v307 = vsel %vm306, %v302, inf
        %308 = vmin.xlane.f32.xlu0 %v307
        %v309 = vpop.xlane.xlu0 %308
        %v310 = vcvt.f32.s32 %v309
        %v311 = vcvt.f32.s32 %v305
        %v312 = vshll.u32 %v311, 16
        %v313 = vadd.s32 %v312, %v310
        %v314 = vand.u32 %v299, 65535
        %v315 = vshra.s32 %v299, 16
        %v316 = vcvt.s32.f32 %v314
        %v317 = vcvt.s32.f32 %v315
        %318 = vmin.xlane.f32.xlu0 %v317
        %v319 = vpop.xlane.xlu0 %318
        %vm320 = vcmp.eq.f32.partialorder %v317, %v319
        %v321 = vsel %vm320, %v316, inf
        %322 = vmin.xlane.f32.xlu0 %v321
        %v323 = vpop.xlane.xlu0 %322
        %v324 = vcvt.f32.s32 %v323
        %v325 = vcvt.f32.s32 %v319
        %v326 = vshll.u32 %v325, 16
        %v327 = vadd.s32 %v326, %v324
        %vm328 = vcmp.eq.s32.totalorder %v284, %v313
        %vm329 = vcmp.eq.s32.totalorder %v285, %v327
        %v330 = vsel %vm328, -inf, %v282
        %v331 = vsel %vm329, -inf, %v283
        %vm332 = vcmp.eq.s32.totalorder %v281, %v313
        %vm333 = vcmp.eq.s32.totalorder %v281, %v327
        %v334 = vsel %vm332, -inf, %v271
        %v335 = vsel %vm333, -inf, %v274
        %vm336 = vcmp.gt.f32.partialorder %v334, %v330
        %vm337 = vcmp.gt.f32.partialorder %v335, %v331
        %v338 = vsel %vm336, %v334, %v330
        %v339 = vsel %vm337, %v335, %v331
        %v340 = vsel %vm336, %v281, %v284
        %v341 = vsel %vm337, %v281, %v285
        %342 = vmax.xlane.f32.xlu0 %v338
        %v343 = vpop.xlane.xlu0 %342
        %344 = vmax.xlane.f32.xlu0 %v339
        %v345 = vpop.xlane.xlu0 %344
        %vm346 = vcmp.eq.f32.partialorder %v338, %v343
        %vm347 = vcmp.eq.f32.partialorder %v339, %v345
        %v348 = vsel %vm346, %v340, 2147483647
        %v349 = vsel %vm347, %v341, 2147483647
        %v350 = vand.u32 %v348, 65535
        %v351 = vshra.s32 %v348, 16
        %v352 = vcvt.s32.f32 %v350
        %v353 = vcvt.s32.f32 %v351
        %354 = vmin.xlane.f32.xlu0 %v353
        %v355 = vpop.xlane.xlu0 %354
        %vm356 = vcmp.eq.f32.partialorder %v353, %v355
        %v357 = vsel %vm356, %v352, inf
        %358 = vmin.xlane.f32.xlu0 %v357
        %v359 = vpop.xlane.xlu0 %358
        %v360 = vcvt.f32.s32 %v359
        %v361 = vcvt.f32.s32 %v355
        %v362 = vshll.u32 %v361, 16
        %v363 = vadd.s32 %v362, %v360
        %v364 = vand.u32 %v349, 65535
        %v365 = vshra.s32 %v349, 16
        %v366 = vcvt.s32.f32 %v364
        %v367 = vcvt.s32.f32 %v365
        %368 = vmin.xlane.f32.xlu0 %v367
        %v369 = vpop.xlane.xlu0 %368
        %vm370 = vcmp.eq.f32.partialorder %v367, %v369
        %v371 = vsel %vm370, %v366, inf
        %372 = vmin.xlane.f32.xlu0 %v371
        %v373 = vpop.xlane.xlu0 %372
        %v374 = vcvt.f32.s32 %v373
        %v375 = vcvt.f32.s32 %v369
        %v376 = vshll.u32 %v375, 16
        %v377 = vadd.s32 %v376, %v374
        %vm378 = vcmp.eq.s32.totalorder %v284, %v363
        %vm379 = vcmp.eq.s32.totalorder %v285, %v377
        %v380 = vsel %vm378, -inf, %v330
        %v381 = vsel %vm379, -inf, %v331
        %vm382 = vcmp.eq.s32.totalorder %v281, %v363
        %vm383 = vcmp.eq.s32.totalorder %v281, %v377
        %v384 = vsel %vm382, -inf, %v334
        %v385 = vsel %vm383, -inf, %v335
        %vm386 = vcmp.gt.f32.partialorder %v384, %v380
        %vm387 = vcmp.gt.f32.partialorder %v385, %v381
        %v388 = vsel %vm386, %v384, %v380
        %v389 = vsel %vm387, %v385, %v381
        %v390 = vsel %vm386, %v281, %v284
        %v391 = vsel %vm387, %v281, %v285
        %392 = vmax.xlane.f32.xlu0 %v388
        %v393 = vpop.xlane.xlu0 %392
        %394 = vmax.xlane.f32.xlu0 %v389
        %v395 = vpop.xlane.xlu0 %394
        %vm396 = vcmp.eq.f32.partialorder %v388, %v393
        %vm397 = vcmp.eq.f32.partialorder %v389, %v395
        %v398 = vsel %vm396, %v390, 2147483647
        %v399 = vsel %vm397, %v391, 2147483647
        %v400 = vand.u32 %v398, 65535
        %v401 = vshra.s32 %v398, 16
        %v402 = vcvt.s32.f32 %v400
        %v403 = vcvt.s32.f32 %v401
        %404 = vmin.xlane.f32.xlu0 %v403
        %v405 = vpop.xlane.xlu0 %404
        %vm406 = vcmp.eq.f32.partialorder %v403, %v405
        %v407 = vsel %vm406, %v402, inf
        %408 = vmin.xlane.f32.xlu0 %v407
        %v409 = vpop.xlane.xlu0 %408
        %v410 = vcvt.f32.s32 %v409
        %v411 = vcvt.f32.s32 %v405
        %v412 = vshll.u32 %v411, 16
        %v413 = vadd.s32 %v412, %v410
        %v414 = vand.u32 %v399, 65535
        %v415 = vshra.s32 %v399, 16
        %v416 = vcvt.s32.f32 %v414
        %v417 = vcvt.s32.f32 %v415
        %418 = vmin.xlane.f32.xlu0 %v417
        %v419 = vpop.xlane.xlu0 %418
        %vm420 = vcmp.eq.f32.partialorder %v417, %v419
        %v421 = vsel %vm420, %v416, inf
        %422 = vmin.xlane.f32.xlu0 %v421
        %v423 = vpop.xlane.xlu0 %422
        %v424 = vcvt.f32.s32 %v423
        %v425 = vcvt.f32.s32 %v419
        %v426 = vshll.u32 %v425, 16
        %v427 = vadd.s32 %v426, %v424
        %vm428 = vcmp.eq.s32.totalorder %v284, %v413
        %vm429 = vcmp.eq.s32.totalorder %v285, %v427
        %v430 = vsel %vm428, -inf, %v380
        %v431 = vsel %vm429, -inf, %v381
        %vm432 = vcmp.eq.s32.totalorder %v281, %v413
        %vm433 = vcmp.eq.s32.totalorder %v281, %v427
        %v434 = vsel %vm432, -inf, %v384
        %v435 = vsel %vm433, -inf, %v385
        %vm436 = vcmp.gt.f32.partialorder %v434, %v430
        %vm437 = vcmp.gt.f32.partialorder %v435, %v431
        %v438 = vsel %vm436, %v434, %v430
        %v439 = vsel %vm437, %v435, %v431
        %v440 = vsel %vm436, %v281, %v284
        %v441 = vsel %vm437, %v281, %v285
        %442 = vmax.xlane.f32.xlu0 %v438
        %v443 = vpop.xlane.xlu0 %442
        %444 = vmax.xlane.f32.xlu0 %v439
        %v445 = vpop.xlane.xlu0 %444
        %vm446 = vcmp.eq.f32.partialorder %v438, %v443
        %vm447 = vcmp.eq.f32.partialorder %v439, %v445
        %v448 = vsel %vm446, %v440, 2147483647
        %v449 = vsel %vm447, %v441, 2147483647
        %v450 = vand.u32 %v448, 65535
        %v451 = vshra.s32 %v448, 16
        %v452 = vcvt.s32.f32 %v450
        %v453 = vcvt.s32.f32 %v451
        %454 = vmin.xlane.f32.xlu0 %v453
        %v455 = vpop.xlane.xlu0 %454
        %vm456 = vcmp.eq.f32.partialorder %v453, %v455
        %v457 = vsel %vm456, %v452, inf
        %458 = vmin.xlane.f32.xlu0 %v457
        %v459 = vpop.xlane.xlu0 %458
        %v460 = vcvt.f32.s32 %v459
        %v461 = vcvt.f32.s32 %v455
        %v462 = vshll.u32 %v461, 16
        %v463 = vadd.s32 %v462, %v460
        %v464 = vand.u32 %v449, 65535
        %v465 = vshra.s32 %v449, 16
        %v466 = vcvt.s32.f32 %v464
        %v467 = vcvt.s32.f32 %v465
        %468 = vmin.xlane.f32.xlu0 %v467
        %v469 = vpop.xlane.xlu0 %468
        %vm470 = vcmp.eq.f32.partialorder %v467, %v469
        %v471 = vsel %vm470, %v466, inf
        %472 = vmin.xlane.f32.xlu0 %v471
        %v473 = vpop.xlane.xlu0 %472
        %v474 = vcvt.f32.s32 %v473
        %v475 = vcvt.f32.s32 %v469
        %v476 = vshll.u32 %v475, 16
        %v477 = vadd.s32 %v476, %v474
        %vm478 = vcmp.eq.s32.totalorder %v284, %v463
        %vm479 = vcmp.eq.s32.totalorder %v285, %v477
        %v480 = vsel %vm478, -inf, %v430
        %v481 = vsel %vm479, -inf, %v431
        %vm482 = vcmp.eq.s32.totalorder %v281, %v463
        %vm483 = vcmp.eq.s32.totalorder %v281, %v477
        %v484 = vsel %vm482, -inf, %v434
        %v485 = vsel %vm483, -inf, %v435
        %vm486 = vcmp.gt.f32.partialorder %v484, %v480
        %vm487 = vcmp.gt.f32.partialorder %v485, %v481
        %v488 = vsel %vm486, %v484, %v480
        %v489 = vsel %vm487, %v485, %v481
        %v490 = vsel %vm486, %v281, %v284
        %v491 = vsel %vm487, %v281, %v285
        %492 = vmax.xlane.f32.xlu0 %v488
        %v493 = vpop.xlane.xlu0 %492
        %494 = vmax.xlane.f32.xlu0 %v489
        %v495 = vpop.xlane.xlu0 %494
        %vm496 = vcmp.eq.f32.partialorder %v488, %v493
        %vm497 = vcmp.eq.f32.partialorder %v489, %v495
        %v498 = vsel %vm496, %v490, 2147483647
        %v499 = vsel %vm497, %v491, 2147483647
        %v500 = vand.u32 %v498, 65535
        %v501 = vshra.s32 %v498, 16
        %v502 = vcvt.s32.f32 %v500
        %v503 = vcvt.s32.f32 %v501
        %504 = vmin.xlane.f32.xlu0 %v503
        %v505 = vpop.xlane.xlu0 %504
        %vm506 = vcmp.eq.f32.partialorder %v503, %v505
        %v507 = vsel %vm506, %v502, inf
        %508 = vmin.xlane.f32.xlu0 %v507
        %v509 = vpop.xlane.xlu0 %508
        %v510 = vcvt.f32.s32 %v509
        %v511 = vcvt.f32.s32 %v505
        %v512 = vshll.u32 %v511, 16
        %v513 = vadd.s32 %v512, %v510
        %v514 = vand.u32 %v499, 65535
        %v515 = vshra.s32 %v499, 16
        %v516 = vcvt.s32.f32 %v514
        %v517 = vcvt.s32.f32 %v515
        %518 = vmin.xlane.f32.xlu0 %v517
        %v519 = vpop.xlane.xlu0 %518
        %vm520 = vcmp.eq.f32.partialorder %v517, %v519
        %v521 = vsel %vm520, %v516, inf
        %522 = vmin.xlane.f32.xlu0 %v521
        %v523 = vpop.xlane.xlu0 %522
        %v524 = vcvt.f32.s32 %v523
        %v525 = vcvt.f32.s32 %v519
        %v526 = vshll.u32 %v525, 16
        %v527 = vadd.s32 %v526, %v524
        %p528 = scmp.ne.s32.totalorder %s22, 3
        // Predicated region
        $region41: #{tpu_custom_call.1} parent=27 // pred_check
          %p529 = pneg %p528
        $region42: #{tpu_custom_call.1} parent=27 // pred_check_branch
          %531 = sbr.rel (%p529) target = $region44
        $region43: #{tpu_custom_call.1} parent=27 // pred_region
          %vm532 = vcmp.eq.s32.totalorder %v278, 0
          %v533 = vsel %vm532, 1, 0
          %vm534 = vcmp.eq.s32.totalorder %v533, 1
          %v535 = vsel %vm534, %v293, -inf
          %v536 = vsel %vm534, %v295, -inf
          %v537 = vsel %vm534, %v313, 2147483647
          %v538 = vsel %vm534, %v327, 2147483647
          %vm539 = vcmp.eq.s32.totalorder %v278, 1
          %v540 = vsel %vm539, 1, 0
          %vm541 = vcmp.eq.s32.totalorder %v540, 1
          %v542 = vsel %vm541, %v343, %v535
          %v543 = vsel %vm541, %v345, %v536
          %v544 = vsel %vm541, %v363, %v537
          %v545 = vsel %vm541, %v377, %v538
          %vm546 = vcmp.eq.s32.totalorder %v278, 2
          %v547 = vsel %vm546, 1, 0
          %vm548 = vcmp.eq.s32.totalorder %v547, 1
          %v549 = vsel %vm548, %v393, %v542
          %v550 = vsel %vm548, %v395, %v543
          %v551 = vsel %vm548, %v413, %v544
          %v552 = vsel %vm548, %v427, %v545
          %vm553 = vcmp.eq.s32.totalorder %v278, 3
          %v554 = vsel %vm553, 1, 0
          %vm555 = vcmp.eq.s32.totalorder %v554, 1
          %v556 = vsel %vm555, %v443, %v549
          %v557 = vsel %vm555, %v445, %v550
          %v558 = vsel %vm555, %v463, %v551
          %v559 = vsel %vm555, %v477, %v552
          %vm560 = vcmp.eq.s32.totalorder %v278, 4
          %v561 = vsel %vm560, 1, 0
          %vm562 = vcmp.eq.s32.totalorder %v561, 1
          %v563 = vsel %vm562, %v493, %v556
          %v564 = vsel %vm562, %v495, %v557
          %v565 = vsel %vm562, %v513, %v558
          %v566 = vsel %vm562, %v527, %v559
          %567 = vst [vmem:[#allocation2] sm:$0xff] %v563
          %568 = vst [vmem:[#allocation2 + $0x8] sm:$0xff] %v564
          %569 = vst [vmem:[#allocation3] sm:$0xff] %v565
          %570 = vst [vmem:[#allocation3 + $0x8] sm:$0xff] %v566
        $region44: #{tpu_custom_call.1} parent=27 // pred_fallthru
          _
        %p571 = scmp.eq.s32.totalorder %s22, 3
        // Predicated region
        $region45: #{tpu_custom_call.1} parent=27 // pred_check
          %p572 = pneg %p571
        $region46: #{tpu_custom_call.1} parent=27 // pred_check_branch
          %574 = sbr.rel (%p572) target = $region48
        $region47: #{tpu_custom_call.1} parent=27 // pred_region
          %vm575 = vcmask 7168
          %v576 = vsel %vm575, %v313, %v363
          %v577 = vsel %vm575, %v327, %v377
          %vm578 = vcmask 15360
          %v579 = vsel %vm578, %v576, %v413
          %v580 = vsel %vm578, %v577, %v427
          %vm581 = vcmask 23552
          %v582 = vsel %vm581, %v579, %v463
          %v583 = vsel %vm581, %v580, %v477
          %vm584 = vcmask 31744
          %v585 = vsel %vm584, %v582, %v513
          %v586 = vsel %vm584, %v583, %v527
          %vm587 = vcmask 39936
          %588 = vst.msk [vmem:[%s198] sm:$0xff] %vm587, %v585
          %589 = vst.msk [vmem:[%s198 + $0x8] sm:$0xff] %vm587, %v586
        $region48: #{tpu_custom_call.1} parent=27 // pred_fallthru
          _
        %s590 = smul.u32 2, %s21
        %p591 = scmp.lt.s32.totalorder %s590, 1
        %s592 = scalar_select %p591, %s590, 1
        %s593 = smul.addr %s592, 8
        %s594 = scalar_lea.vmem %s2, %s593
        // Predicated region
        $region49: #{tpu_custom_call.1} parent=27 // pred_check
          %p595 = pneg %p99
        $region50: #{tpu_custom_call.1} parent=27 // pred_check_branch
          %597 = sbr.rel (%p595) target = $region52
        $region51: #{tpu_custom_call.1} parent=27 // pred_region
          %s598 = smul.u32 2, %s21
        $region52: #{tpu_custom_call.1} parent=27 // pred_fallthru
          _
        // Predicated region
        $region53: #{tpu_custom_call.1} parent=27 // pred_check
          %p599 = pneg %p99
        $region54: #{tpu_custom_call.1} parent=27 // pred_check_branch
          %601 = sbr.rel (%p599) target = $region56
        $region55: #{tpu_custom_call.1} parent=27 // pred_region
          %s602 = smul.u32 2, %s21
          %p603 = scmp.lt.s32.totalorder %s602, 1
          %s604 = scalar_select %p603, %s602, 1
          %s605 = smul.addr %s604, 8
          %s606 = scalar_lea.vmem %s2, %s605
        $region56: #{tpu_custom_call.1} parent=27 // pred_fallthru
          _
      $region28: #{tpu_custom_call.1} parent=5 // pred_fallthru
        _
      %p607 = scmp.le.s32.totalorder 2, %s12
      // Predicated region
      $region57: #{tpu_custom_call.1} parent=5 // pred_check
        %p608 = pneg %p607
      $region58: #{tpu_custom_call.1} parent=5 // pred_check_branch
        %610 = sbr.rel (%p608) target = $region60
      $region59: #{tpu_custom_call.1} parent=5 // pred_region
        %s611 = ssub.s32 %s12, 2
      $region60: #{tpu_custom_call.1} parent=5 // pred_fallthru
        _
    $region6: #{tpu_custom_call.1} parent=1 // loop_footer
      %s16 = sadd.s32 1, %s12
    $region7: #{tpu_custom_call.1} parent=1 // loop_footer_branch
      %11 = sbr.rel target = $region3
    $region8: #{tpu_custom_call.1} parent=1 // loop_exit
      _
    %612 = vsyncpa [#allocation5], 1
    %s613 = scalar_lea.sflag [#allocation5], 1
    %614 = vsyncpa %s613, 1
    %615 = vsyncpa [#allocation7], 1
    %s616 = scalar_lea.sflag [#allocation7], 1
    %617 = vsyncpa %s616, 1

</llo_original>
